<compile_context>
chip_gen: v7x
topology: tpu7x:2x2x1
jax: 0.10.0
libtpu: 0.0.40
codegen_flags: <defaults>
</compile_context>

<pallas_src>
import math

import jax
import jax.numpy as jnp
from jax.experimental import pallas as pl
from jax.experimental.pallas import tpu as pltpu

_LANES = 128
_MIN_TILE_BYTES = 1 << 20   # don't shrink tiles below ~1 MiB when splitting
_TARGET_BLOCKS = 4          # >= 2 grid steps per TensorCore on v7x megacore


def _make_squareplus_kernel(a2: float):
    # NOTE: a2 is a Python float so it lowers as a literal (no captured consts).
    def kernel(x_ref, o_ref):
        x = x_ref[...].astype(jnp.float32)
        # Matches the PyTorch module exactly: (x + sqrt(x*x + a*a)) / 2.
        y = (x + jnp.sqrt(x * x + a2)) * 0.5
        o_ref[...] = y.astype(o_ref.dtype)

    return kernel


def _squareplus_jnp(x, a2: float):
    xf = x.astype(jnp.float32)
    return ((xf + jnp.sqrt(xf * xf + a2)) * 0.5).astype(x.dtype)


def _sublane_multiple(dtype) -> int:
    # Native sublane packing: 8 for 4-byte, 16 for 2-byte, 32 for 1-byte dtypes.
    itemsize = jnp.dtype(dtype).itemsize
    return max(8, 32 // max(1, itemsize))


def _pick_block_rows(rows: int, block_rows: int, dtype) -> int:
    """Largest dtype-aligned row tile, split toward >= _TARGET_BLOCKS grid steps
    (2 per v7x TensorCore) when the input is big enough, with tiles >= ~1 MiB."""
    itemsize = jnp.dtype(dtype).itemsize
    sub = _sublane_multiple(dtype)
    if rows <= sub:
        return rows  # block == full array dim is always legal

    br = max(sub, (min(block_rows, rows) // sub) * sub)

    # Minimum rows that keep a tile at ~1 MiB (per-step overhead dominates below).
    min_rows = max(sub, ((_MIN_TILE_BYTES // (_LANES * itemsize)) // sub) * sub)

    # Only split further if every resulting tile would still be >= min_rows
    # (so single-TC v5e/v6e and small inputs don't pay extra grid steps).
    if pl.cdiv(rows, br) < _TARGET_BLOCKS and rows > _TARGET_BLOCKS * min_rows:
        want = ((pl.cdiv(rows, _TARGET_BLOCKS) + sub - 1) // sub) * sub
        br = max(min_rows, min(br, want))
    return br


def squareplus(x, a=2.0, *, block_rows=8192):
    """Elementwise squareplus: (x + sqrt(x^2 + a^2)) / 2 (matches the PyTorch module)."""
    orig_shape = x.shape
    orig_dtype = x.dtype
    a2 = float(a) * float(a)

    n = math.prod(orig_shape) if orig_shape else 1
    flat = x.reshape(-1)

    n_aligned = (n // _LANES) * _LANES
    if n_aligned == 0:
        # Tiny input (< 128 elements): plain jnp, kernel launch not worth it.
        return _squareplus_jnp(flat, a2).reshape(orig_shape)

    prefix = flat if n_aligned == n else flat[:n_aligned]
    rows = n_aligned // _LANES
    x2d = prefix.reshape(rows, _LANES)

    br = _pick_block_rows(rows, block_rows, orig_dtype)
    grid = (pl.cdiv(rows, br),)

    itemsize = jnp.dtype(orig_dtype).itemsize
    cost = pl.CostEstimate(
        flops=4 * n_aligned,
        transcendentals=n_aligned,
        bytes_accessed=2 * n_aligned * itemsize,
    )

    out2d = pl.pallas_call(
        _make_squareplus_kernel(a2),
        out_shape=jax.ShapeDtypeStruct((rows, _LANES), orig_dtype),
        grid_spec=pltpu.PrefetchScalarGridSpec(
            num_scalar_prefetch=0,
            grid=grid,
            in_specs=[pl.BlockSpec((br, _LANES), lambda i: (i, 0))],
            out_specs=pl.BlockSpec((br, _LANES), lambda i: (i, 0)),
        ),
        compiler_params=pltpu.CompilerParams(
            dimension_semantics=("parallel",),
            vmem_limit_bytes=32 << 20,
        ),
        cost_estimate=cost,
    )(x2d)

    out_flat = out2d.reshape(-1)
    if n_aligned != n:
        # <=127-element tail: handled with plain jnp (no full-array pad/slice pass).
        tail = _squareplus_jnp(flat[n_aligned:], a2)
        out_flat = jnp.concatenate([out_flat, tail])
    return out_flat.reshape(orig_shape)


def _squareplus_ref(x, a=2.0):
    xf = x.astype(jnp.float32)
    return ((xf + jnp.sqrt(xf * xf + float(a) * float(a))) * 0.5).astype(x.dtype)


if __name__ == "__main__":
    key = jax.random.PRNGKey(0)
    # NCHW input, same convention as the PyTorch module.
    x = jax.random.normal(key, (2, 4, 16, 16), dtype=jnp.float32)

    y = squareplus(x, a=2)
    y = jax.block_until_ready(y)

    y_ref = _squareplus_ref(x, a=2)
    assert y.shape == x.shape and y.dtype == x.dtype
    assert jnp.allclose(y, y_ref, atol=1e-6, rtol=1e-6)

    # Also exercise a shape that is NOT a multiple of 128 (aligned-prefix + jnp tail path).
    x2 = jax.random.normal(jax.random.PRNGKey(1), (3, 5, 7, 11), dtype=jnp.float32)
    y2 = jax.block_until_ready(squareplus(x2, a=2))
    assert jnp.allclose(y2, _squareplus_ref(x2, a=2), atol=1e-6, rtol=1e-6)

    # Tiny (< 128 element) input falls back to plain jnp.
    x3 = jax.random.normal(jax.random.PRNGKey(2), (4, 7), dtype=jnp.float32)
    y3 = jax.block_until_ready(squareplus(x3, a=2))
    assert jnp.allclose(y3, _squareplus_ref(x3, a=2), atol=1e-6, rtol=1e-6)

    print("KERNEL_OK")
</pallas_src>

<mosaic_0001>
module attributes {stable_mosaic.version = 11 : i64} {
  func.func @kernel(%arg0: i32, %arg1: memref<16x128xf32, #tpu.memory_space<vmem>>, %arg2: memref<16x128xf32, #tpu.memory_space<vmem>>) attributes {dimension_semantics = [#tpu.dimension_semantics<parallel>], iteration_bounds = array<i64: 1>, scalar_prefetch = 0 : i64, scratch_operands = 0 : i64, tpu.core_type = #tpu.core_type<tc>, window_params = [{transform_indices = @transform_0, window_bounds = array<i64: 16, 128>}, {transform_indices = @transform_1, window_bounds = array<i64: 16, 128>}]} {
    %c0 = arith.constant 0 : index
    %c0_0 = arith.constant 0 : index
    %0 = vector.load %arg1[%c0, %c0_0] : memref<16x128xf32, #tpu.memory_space<vmem>>, vector<16x128xf32>
    %1 = arith.mulf %0, %0 : vector<16x128xf32>
    %cst = arith.constant 4.000000e+00 : f32
    %2 = vector.broadcast %cst : f32 to vector<16x128xf32>
    %3 = arith.addf %1, %2 : vector<16x128xf32>
    %4 = math.sqrt %3 : vector<16x128xf32>
    %5 = arith.addf %0, %4 : vector<16x128xf32>
    %cst_1 = arith.constant 5.000000e-01 : f32
    %6 = vector.broadcast %cst_1 : f32 to vector<16x128xf32>
    %7 = arith.mulf %5, %6 : vector<16x128xf32>
    %c0_2 = arith.constant 0 : index
    %c0_3 = arith.constant 0 : index
    %8 = vector.load %arg2[%c0_2, %c0_3] : memref<16x128xf32, #tpu.memory_space<vmem>>, vector<16x128xf32>
    tpu.vector_store %arg2[%c0_2, %c0_3], %7 {strides = array<i32>} : memref<16x128xf32, #tpu.memory_space<vmem>>, vector<16x128xf32>,
    return
  }
  func.func @transform_0(%arg0: i32) -> (i32, i32) {
    %c0_i32 = arith.constant 0 : i32
    %c0_i32_0 = arith.constant 0 : i32
    return %arg0, %c0_i32 : i32, i32
  }
  func.func @transform_1(%arg0: i32) -> (i32, i32) {
    %c0_i32 = arith.constant 0 : i32
    %c0_i32_0 = arith.constant 0 : i32
    return %arg0, %c0_i32 : i32, i32
  }
}

</mosaic_0001>

<llo_original>
// kernel: tpu_custom_call.1
$region0: #{tpu_custom_call.1}
  #allocation0 [shape = 'u32[]', space=smem, size = 0x4, offset = 0x4, fixed_abs, tag = 'smem constant byte address 0x4 - core index']
  #allocation1 [shape = 'u32[144,128]{1,0:T(1,128)}', space=vmem, size = 0x12000, scoped, tag = 'internal scratch']
  %s0 = inlined_call_operand.hbm [shape: f32[16,128], index: 0, kind: input, shape index: {}]
  %s1 = inlined_call_operand.hbm [shape: f32[16,128], index: 1, kind: output, shape index: {}]
  %s2 = sld [smem:[#allocation0]]
  $region18: #{tpu_custom_call.1} parent=0
    _
  %s4 = ssub.s32 1, %s2
  %s5 = scalar_select 0, %s4, %s2
  $region1: #{tpu_custom_call.1} parent=0
    #allocation2 [shape = 'u8[8192]{0}', space=vmem, size = 0x2000, scoped, tag = 'input window, operand 0, single buffered']
    #allocation3 [shape = 's32[1]{0}', space=sflag, size = 0x4, scoped, tag = 'scoped memory for tpu_custom_call.1']
    #allocation4 [shape = 's32[1]{0}', space=sflag, size = 0x4, scoped, tag = 'scoped memory for tpu_custom_call.1']
    #allocation5 [shape = 'u8[8192]{0}', space=vmem, size = 0x2000, scoped, tag = 'output window, operand 0, single buffered']
    %6 = vsyncpa [#allocation3], 0
    %7 = vsyncpa [#allocation4], 0
    // Predicated region
    $region2: #{tpu_custom_call.1} parent=1 // pred_check
      _
    $region3: #{tpu_custom_call.1} parent=1 // pred_check_branch
      %9 = sbr.rel (0) target = $region5
    $region4: #{tpu_custom_call.1} parent=1 // pred_region
      %s11 = ssub.s32 256, 256
      %12 = vsyncadd [#allocation3], %s11
      %s13 = sshll.u32 [#allocation2], 4
      %s14 = int_to_ptr.vmem [resolvable:$true] %s13
      %19 = dma.hbm_to_vmem [thread:$0]  %s0, 256, %s14, [#allocation3], 128, 128, 8
    $region5: #{tpu_custom_call.1} parent=1 // pred_fallthru
      _
    // Predicated region
    $region6: #{tpu_custom_call.1} parent=1 // pred_check
      _
    $region7: #{tpu_custom_call.1} parent=1 // pred_check_branch
      %21 = sbr.rel (0) target = $region9
    $region8: #{tpu_custom_call.1} parent=1 // pred_region
      %22 = dma.done [#allocation3], 256
    $region9: #{tpu_custom_call.1} parent=1 // pred_fallthru
      _
    %v23 = vld [vmem:[#allocation2] sm:$0xff]
    %v24 = vld [vmem:[#allocation2 + $0x8] sm:$0xff]
    %v25 = vmul.f32 %v23, %v23
    %v26 = vmul.f32 %v24, %v24
    %v27 = vadd.f32 %v25, 4.0
    %v28 = vadd.f32 %v26, 4.0
    %v29 = vrsqrt.pop %v27
    %v30 = vmul.f32 %v27, %v29
    %vm31 = vcmp.eq.f32.partialorder %v27, inf
    %v32 = vsel %vm31, %v27, %v30
    %vm33 = vcmp.eq.f32.partialorder %v27, 0.0
    %v34 = vand.u32 %v27, 2147483648
    %v35 = vsel %vm33, %v34, %v32
    %v36 = vrsqrt.pop %v28
    %v37 = vmul.f32 %v28, %v36
    %vm38 = vcmp.eq.f32.partialorder %v28, inf
    %v39 = vsel %vm38, %v28, %v37
    %vm40 = vcmp.eq.f32.partialorder %v28, 0.0
    %v41 = vand.u32 %v28, 2147483648
    %v42 = vsel %vm40, %v41, %v39
    %v43 = vadd.f32 %v23, %v35
    %v44 = vadd.f32 %v24, %v42
    %v45 = vmul.f32 %v43, 0.5
    %v46 = vmul.f32 %v44, 0.5
    %47 = vst [vmem:[#allocation5] sm:$0xff] %v45
    %48 = vst [vmem:[#allocation5 + $0x8] sm:$0xff] %v46
    // Predicated region
    $region10: #{tpu_custom_call.1} parent=1 // pred_check
      _
    $region11: #{tpu_custom_call.1} parent=1 // pred_check_branch
      %50 = sbr.rel (0) target = $region13
    $region12: #{tpu_custom_call.1} parent=1 // pred_region
      %s52 = ssub.s32 256, 256
      %53 = vsyncadd [#allocation4], %s52
      %s54 = sshll.u32 [#allocation5], 4
      %s55 = int_to_ptr.vmem [resolvable:$true] %s54
      %60 = dma.vmem_to_hbm [thread:$0]  %s55, 256, %s1, [#allocation4], 128, 128, 8
    $region13: #{tpu_custom_call.1} parent=1 // pred_fallthru
      _
    // Predicated region
    $region14: #{tpu_custom_call.1} parent=1 // pred_check
      _
    $region15: #{tpu_custom_call.1} parent=1 // pred_check_branch
      %62 = sbr.rel (0) target = $region17
    $region16: #{tpu_custom_call.1} parent=1 // pred_region
      %63 = dma.done [#allocation4], 256
    $region17: #{tpu_custom_call.1} parent=1 // pred_fallthru
      _
    %64 = vsyncpa [#allocation3], 1
    %65 = vsyncpa [#allocation4], 1

</llo_original>
